<compile_context>
chip_gen: v7x
topology: tpu7x:2x2x1
jax: 0.10.0
libtpu: 0.0.40
codegen_flags: <defaults>
</compile_context>

<pallas_src>
import functools

import numpy as np
import jax
import jax.numpy as jnp
from jax import lax
from jax.experimental import pallas as pl
from jax.experimental.pallas import tpu as pltpu


def lowrank2d_kernel(vt_ref, w1t_ref, b1t_ref, w2pt_ref, b2pt_ref,
                     w2st_ref, b2st_ref, e_ref, gt_ref, out_ref, *, kw):
    vt = vt_ref[0]                                       # (I, N), N in lanes

    # Fused first layer (phi rows stacked above psi rows):
    #   h^T = relu(W1cat^T @ v^T + b1cat^T)              -> (2KW, N)
    # NOTE: contraction depth is only I; kept on the MXU for simplicity — move
    # to I broadcast-FMAs on the VPU only if the vex slot ever binds.
    ht = jnp.maximum(
        jnp.dot(w1t_ref[...], vt, preferred_element_type=jnp.float32)
        + b1t_ref[...], 0.0)

    # phi/psi halves: sublane views at offsets 0 / KW (multiples of 8) -> free.
    h_phi = ht[:kw, :]                                   # (KW, N)
    h_psi = ht[kw:, :]                                   # (KW, N)

    # Separate second layers (no zero-padded block diagonal).
    phit = (jnp.dot(w2pt_ref[...], h_phi, preferred_element_type=jnp.float32)
            + b2pt_ref[...])                             # (K, N)
    psit = (jnp.dot(w2st_ref[...], h_psi, preferred_element_type=jnp.float32)
            + b2st_ref[...])                             # (K, N)

    # T_full[i, k] = sum_n v^T[i, n] * psi^T[k, n]       (MXU, contract over N)
    t_full = lax.dot_general(vt, psit, (((1,), (1,)), ((), ())),
                             preferred_element_type=jnp.float32)      # (I, K)
    # t[k] = T_full[i(k), k]                             (tiny sublane mask-sum)
    t = jnp.sum(e_ref[...] * t_full, axis=0, keepdims=True)           # (1, K)

    # out^T = (G^T * t) @ phi^T                          (NN matmul, lane-dense N)
    tgt = gt_ref[...] * t                                # (O, K)
    out_ref[0] = jnp.dot(tgt, phit, preferred_element_type=jnp.float32)


def lowrank2d(v, params, *, out_channels, rank, channels_last=True):
    """v: (B, N, I), N = s*s.  Returns (B, N, O) (module layout) or (B, O, N)."""
    B, N, I = v.shape
    KW = params["w1_phi"].shape[1]
    O = out_channels
    R = rank
    K = O * I * R
    f32 = jnp.float32

    # Transposed / fused parameters (host-side one-time glue).
    w1t = jnp.concatenate([params["w1_phi"], params["w1_psi"]], axis=1).T  # (2KW, I)
    b1t = jnp.concatenate([params["b1_phi"], params["b1_psi"]], axis=1).T  # (2KW, 1)
    w2pt = params["w2_phi"].T                                              # (K, KW)
    b2pt = params["b2_phi"].T                                              # (K, 1)
    w2st = params["w2_psi"].T                                              # (K, KW)
    b2st = params["b2_psi"].T                                              # (K, 1)

    # 0/1 index maps for k <-> (o, i, r).
    kk = np.arange(K)
    E = (((kk // R) % I)[None, :] == np.arange(I)[:, None]).astype(np.float32)   # (I, K)
    GT = ((kk // (I * R))[None, :] == np.arange(O)[:, None]).astype(np.float32)  # (O, K)
    E = jnp.asarray(E)
    GT = jnp.asarray(GT)

    # N-in-lanes: channels-first view of v (single wrapper transpose).
    vt = jnp.swapaxes(v, 1, 2).astype(f32)               # (B, I, N)

    def _full(shape):
        zeros = (0,) * len(shape)
        return pl.BlockSpec(shape, lambda b, _z=zeros: _z)

    flops = int(2 * B * N * (I * 2 * KW + 2 * KW * K + I * K + O * K))
    bytes_accessed = int(4 * (v.size + B * O * N + 2 * KW * (I + 1)
                              + 2 * K * (KW + 1) + (I + O) * K))

    # Per-step VMEM footprint: double-buffered in/out blocks + resident weights
    # + intermediates.  Only raise the scoped limit when needed, cap at 32 MiB
    # so v7x (64 MiB physical) keeps headroom.
    step_bytes = 4 * (I + O) * N
    weight_bytes = 4 * (2 * KW * (I + 1) + 2 * K * (KW + 1) + (I + O) * K)
    interm_bytes = 4 * ((2 * KW + 2 * K + O) * N + (I + O) * K + K)
    vmem_needed = 2 * step_bytes + weight_bytes + 2 * interm_bytes
    vmem_limit = None
    if vmem_needed > 16 * 1024 * 1024:
        vmem_limit = int(min(32 * 1024 * 1024, 2 * vmem_needed))

    kernel = functools.partial(lowrank2d_kernel, kw=KW)

    out_t = pl.pallas_call(
        kernel,
        out_shape=jax.ShapeDtypeStruct((B, O, N), f32),
        grid=(B,),
        in_specs=[
            pl.BlockSpec((1, I, N), lambda b: (b, 0, 0)),
            _full((2 * KW, I)), _full((2 * KW, 1)),
            _full((K, KW)), _full((K, 1)),
            _full((K, KW)), _full((K, 1)),
            _full((I, K)), _full((O, K)),
        ],
        out_specs=pl.BlockSpec((1, O, N), lambda b: (b, 0, 0)),
        compiler_params=pltpu.CompilerParams(
            dimension_semantics=("parallel",),
            vmem_limit_bytes=vmem_limit),
        cost_estimate=pl.CostEstimate(
            flops=flops, transcendentals=0, bytes_accessed=bytes_accessed),
    )(vt, w1t, b1t, w2pt, b2pt, w2st, b2st, E, GT)

    if channels_last:
        # Module layout (B, N, O).  Consumers that accept channels-first output
        # can pass channels_last=False and skip this extra XLA transpose.
        return jnp.swapaxes(out_t, 1, 2)
    return out_t


def lowrank2d_reference(v, params, *, out_channels, rank):
    """Pure-JAX reference mirroring the PyTorch module."""
    B, N, I = v.shape
    hp = jax.lax.Precision.HIGHEST

    def mlp(x, w1, b1, w2, b2):
        h = jax.nn.relu(jnp.matmul(x, w1, precision=hp) + b1)
        return jnp.matmul(h, w2, precision=hp) + b2

    phi = mlp(v, params["w1_phi"], params["b1_phi"],
              params["w2_phi"], params["b2_phi"]).reshape(B, N, out_channels, I, rank)
    psi = mlp(v, params["w1_psi"], params["b1_psi"],
              params["w2_psi"], params["b2_psi"]).reshape(B, N, out_channels, I, rank)
    return jnp.einsum('bnoir,bni,bmoir->bmo', psi, v, phi, precision=hp)


if __name__ == "__main__":
    # Small shapes consistent with the module.
    batch = 2
    in_channels = 4
    out_channels = 4
    s = 8
    n = s * s
    ker_width = 16
    rank = 2
    K = in_channels * out_channels * rank

    key = jax.random.PRNGKey(0)
    kv, k1, k2, k3, k4, k5, k6, k7, k8 = jax.random.split(key, 9)

    # Deterministic synthetic parameters (weights stored as (in, out), i.e.
    # already transposed relative to torch.nn.Linear's (out, in)).
    scale = 0.1
    params = {
        "w1_phi": scale * jax.random.normal(k1, (in_channels, ker_width), jnp.float32),
        "b1_phi": scale * jax.random.normal(k2, (1, ker_width), jnp.float32),
        "w2_phi": scale * jax.random.normal(k3, (ker_width, K), jnp.float32),
        "b2_phi": scale * jax.random.normal(k4, (1, K), jnp.float32),
        "w1_psi": scale * jax.random.normal(k5, (in_channels, ker_width), jnp.float32),
        "b1_psi": scale * jax.random.normal(k6, (1, ker_width), jnp.float32),
        "w2_psi": scale * jax.random.normal(k7, (ker_width, K), jnp.float32),
        "b2_psi": scale * jax.random.normal(k8, (1, K), jnp.float32),
    }

    v = jax.random.normal(kv, (batch, n, in_channels), jnp.float32)

    out = lowrank2d(v, params, out_channels=out_channels, rank=rank)
    out = jax.block_until_ready(out)

    ref = lowrank2d_reference(v, params, out_channels=out_channels, rank=rank)
    ref = jax.block_until_ready(ref)

    np.testing.assert_allclose(np.asarray(out), np.asarray(ref),
                               rtol=1e-4, atol=1e-4)
    print("KERNEL_OK")
</pallas_src>

<mosaic_0001>
module attributes {stable_mosaic.version = 11 : i64} {
  func.func @lowrank2d_kernel(%arg0: i32, %arg1: memref<1x4x64xf32, #tpu.memory_space<vmem>>, %arg2: memref<32x4xf32, #tpu.memory_space<vmem>>, %arg3: memref<32x1xf32, #tpu.memory_space<vmem>>, %arg4: memref<32x16xf32, #tpu.memory_space<vmem>>, %arg5: memref<32x1xf32, #tpu.memory_space<vmem>>, %arg6: memref<32x16xf32, #tpu.memory_space<vmem>>, %arg7: memref<32x1xf32, #tpu.memory_space<vmem>>, %arg8: memref<4x32xf32, #tpu.memory_space<vmem>>, %arg9: memref<4x32xf32, #tpu.memory_space<vmem>>, %arg10: memref<1x4x64xf32, #tpu.memory_space<vmem>>) attributes {dimension_semantics = [#tpu.dimension_semantics<parallel>], iteration_bounds = array<i64: 2>, scalar_prefetch = 0 : i64, scratch_operands = 0 : i64, tpu.core_type = #tpu.core_type<tc>, window_params = [{transform_indices = @transform_0, window_bounds = array<i64: 1, 4, 64>}, {pipeline_mode = #tpu.pipeline_mode<synchronous>, transform_indices = @transform_1, window_bounds = array<i64: 32, 4>}, {pipeline_mode = #tpu.pipeline_mode<synchronous>, transform_indices = @transform_2, window_bounds = array<i64: 32, 1>}, {pipeline_mode = #tpu.pipeline_mode<synchronous>, transform_indices = @transform_3, window_bounds = array<i64: 32, 16>}, {pipeline_mode = #tpu.pipeline_mode<synchronous>, transform_indices = @transform_4, window_bounds = array<i64: 32, 1>}, {pipeline_mode = #tpu.pipeline_mode<synchronous>, transform_indices = @transform_5, window_bounds = array<i64: 32, 16>}, {pipeline_mode = #tpu.pipeline_mode<synchronous>, transform_indices = @transform_6, window_bounds = array<i64: 32, 1>}, {pipeline_mode = #tpu.pipeline_mode<synchronous>, transform_indices = @transform_7, window_bounds = array<i64: 4, 32>}, {pipeline_mode = #tpu.pipeline_mode<synchronous>, transform_indices = @transform_8, window_bounds = array<i64: 4, 32>}, {transform_indices = @transform_9, window_bounds = array<i64: 1, 4, 64>}]} {
    %c0 = arith.constant 0 : index
    %c0_0 = arith.constant 0 : index
    %c0_1 = arith.constant 0 : index
    %0 = vector.load %arg1[%c0, %c0_0, %c0_1] : memref<1x4x64xf32, #tpu.memory_space<vmem>>, vector<1x4x64xf32>
    %1 = vector.shape_cast %0 : vector<1x4x64xf32> to vector<4x64xf32>
    %c0_2 = arith.constant 0 : index
    %c0_3 = arith.constant 0 : index
    %2 = vector.load %arg2[%c0_2, %c0_3] : memref<32x4xf32, #tpu.memory_space<vmem>>, vector<32x4xf32>
    %cst = arith.constant dense<0.000000e+00> : vector<32x64xf32>
    %3 = tpu.matmul %2, %1, %cst {dimension_numbers = #tpu.dot_dimension_numbers<[1], [0], [0], [1], [0, 0, 1, 1], [], []>} : vector<32x4xf32>, vector<4x64xf32>, vector<32x64xf32> -> vector<32x64xf32>
    %c0_4 = arith.constant 0 : index
    %c0_5 = arith.constant 0 : index
    %4 = vector.load %arg3[%c0_4, %c0_5] : memref<32x1xf32, #tpu.memory_space<vmem>>, vector<32x1xf32>
    %5 = vector.broadcast %4 : vector<32x1xf32> to vector<32x64xf32>
    %6 = arith.addf %3, %5 : vector<32x64xf32>
    %cst_6 = arith.constant 0.000000e+00 : f32
    %7 = vector.broadcast %cst_6 : f32 to vector<32x64xf32>
    %8 = arith.maximumf %6, %7 : vector<32x64xf32>
    %9 = vector.extract_strided_slice %8 {offsets = [0, 0], sizes = [16, 64], strides = [1, 1]} : vector<32x64xf32> to vector<16x64xf32>
    %10 = vector.extract_strided_slice %8 {offsets = [16, 0], sizes = [16, 64], strides = [1, 1]} : vector<32x64xf32> to vector<16x64xf32>
    %c0_7 = arith.constant 0 : index
    %c0_8 = arith.constant 0 : index
    %11 = vector.load %arg4[%c0_7, %c0_8] : memref<32x16xf32, #tpu.memory_space<vmem>>, vector<32x16xf32>
    %cst_9 = arith.constant dense<0.000000e+00> : vector<32x64xf32>
    %12 = tpu.matmul %11, %9, %cst_9 {dimension_numbers = #tpu.dot_dimension_numbers<[1], [0], [0], [1], [0, 0, 1, 1], [], []>} : vector<32x16xf32>, vector<16x64xf32>, vector<32x64xf32> -> vector<32x64xf32>
    %c0_10 = arith.constant 0 : index
    %c0_11 = arith.constant 0 : index
    %13 = vector.load %arg5[%c0_10, %c0_11] : memref<32x1xf32, #tpu.memory_space<vmem>>, vector<32x1xf32>
    %14 = vector.broadcast %13 : vector<32x1xf32> to vector<32x64xf32>
    %15 = arith.addf %12, %14 : vector<32x64xf32>
    %c0_12 = arith.constant 0 : index
    %c0_13 = arith.constant 0 : index
    %16 = vector.load %arg6[%c0_12, %c0_13] : memref<32x16xf32, #tpu.memory_space<vmem>>, vector<32x16xf32>
    %cst_14 = arith.constant dense<0.000000e+00> : vector<32x64xf32>
    %17 = tpu.matmul %16, %10, %cst_14 {dimension_numbers = #tpu.dot_dimension_numbers<[1], [0], [0], [1], [0, 0, 1, 1], [], []>} : vector<32x16xf32>, vector<16x64xf32>, vector<32x64xf32> -> vector<32x64xf32>
    %c0_15 = arith.constant 0 : index
    %c0_16 = arith.constant 0 : index
    %18 = vector.load %arg7[%c0_15, %c0_16] : memref<32x1xf32, #tpu.memory_space<vmem>>, vector<32x1xf32>
    %19 = vector.broadcast %18 : vector<32x1xf32> to vector<32x64xf32>
    %20 = arith.addf %17, %19 : vector<32x64xf32>
    %cst_17 = arith.constant dense<0.000000e+00> : vector<4x32xf32>
    %21 = tpu.matmul %1, %20, %cst_17 {dimension_numbers = #tpu.dot_dimension_numbers<[1], [1], [0], [0], [0, 0, 1, 0], [], []>} : vector<4x64xf32>, vector<32x64xf32>, vector<4x32xf32> -> vector<4x32xf32>
    %c0_18 = arith.constant 0 : index
    %c0_19 = arith.constant 0 : index
    %22 = vector.load %arg8[%c0_18, %c0_19] : memref<4x32xf32, #tpu.memory_space<vmem>>, vector<4x32xf32>
    %23 = arith.mulf %22, %21 : vector<4x32xf32>
    %cst_20 = arith.constant dense<0.000000e+00> : vector<32xf32>
    %24 = vector.multi_reduction <add>, %23, %cst_20 [0] : vector<4x32xf32> to vector<32xf32>
    %25 = vector.shape_cast %24 : vector<32xf32> to vector<1x32xf32>
    %c0_21 = arith.constant 0 : index
    %c0_22 = arith.constant 0 : index
    %26 = vector.load %arg9[%c0_21, %c0_22] : memref<4x32xf32, #tpu.memory_space<vmem>>, vector<4x32xf32>
    %27 = vector.broadcast %25 : vector<1x32xf32> to vector<4x32xf32>
    %28 = arith.mulf %26, %27 : vector<4x32xf32>
    %cst_23 = arith.constant dense<0.000000e+00> : vector<4x64xf32>
    %29 = tpu.matmul %28, %15, %cst_23 {dimension_numbers = #tpu.dot_dimension_numbers<[1], [0], [0], [1], [0, 0, 1, 1], [], []>} : vector<4x32xf32>, vector<32x64xf32>, vector<4x64xf32> -> vector<4x64xf32>
    %c0_24 = arith.constant 0 : index
    %c0_25 = arith.constant 0 : index
    %c0_26 = arith.constant 0 : index
    %30 = vector.load %arg10[%c0_24, %c0_25, %c0_26] : memref<1x4x64xf32, #tpu.memory_space<vmem>>, vector<1x4x64xf32>
    %31 = vector.shape_cast %30 : vector<1x4x64xf32> to vector<4x64xf32>
    %32 = vector.shape_cast %29 : vector<4x64xf32> to vector<1x4x64xf32>
    tpu.vector_store %arg10[%c0_24, %c0_25, %c0_26], %32 {strides = array<i32>} : memref<1x4x64xf32, #tpu.memory_space<vmem>>, vector<1x4x64xf32>,
    return
  }
  func.func @transform_0(%arg0: i32) -> (i32, i32, i32) {
    %c0_i32 = arith.constant 0 : i32
    %c0_i32_0 = arith.constant 0 : i32
    %c0_i32_1 = arith.constant 0 : i32
    return %arg0, %c0_i32, %c0_i32_0 : i32, i32, i32
  }
  func.func @transform_1(%arg0: i32) -> (i32, i32) {
    %c0_i32 = arith.constant 0 : i32
    %c0_i32_0 = arith.constant 0 : i32
    %c0_i32_1 = arith.constant 0 : i32
    return %c0_i32, %c0_i32_0 : i32, i32
  }
  func.func @transform_2(%arg0: i32) -> (i32, i32) {
    %c0_i32 = arith.constant 0 : i32
    %c0_i32_0 = arith.constant 0 : i32
    %c0_i32_1 = arith.constant 0 : i32
    return %c0_i32, %c0_i32_0 : i32, i32
  }
  func.func @transform_3(%arg0: i32) -> (i32, i32) {
    %c0_i32 = arith.constant 0 : i32
    %c0_i32_0 = arith.constant 0 : i32
    %c0_i32_1 = arith.constant 0 : i32
    return %c0_i32, %c0_i32_0 : i32, i32
  }
  func.func @transform_4(%arg0: i32) -> (i32, i32) {
    %c0_i32 = arith.constant 0 : i32
    %c0_i32_0 = arith.constant 0 : i32
    %c0_i32_1 = arith.constant 0 : i32
    return %c0_i32, %c0_i32_0 : i32, i32
  }
  func.func @transform_5(%arg0: i32) -> (i32, i32) {
    %c0_i32 = arith.constant 0 : i32
    %c0_i32_0 = arith.constant 0 : i32
    %c0_i32_1 = arith.constant 0 : i32
    return %c0_i32, %c0_i32_0 : i32, i32
  }
  func.func @transform_6(%arg0: i32) -> (i32, i32) {
    %c0_i32 = arith.constant 0 : i32
    %c0_i32_0 = arith.constant 0 : i32
    %c0_i32_1 = arith.constant 0 : i32
    return %c0_i32, %c0_i32_0 : i32, i32
  }
  func.func @transform_7(%arg0: i32) -> (i32, i32) {
    %c0_i32 = arith.constant 0 : i32
    %c0_i32_0 = arith.constant 0 : i32
    %c0_i32_1 = arith.constant 0 : i32
    return %c0_i32, %c0_i32_0 : i32, i32
  }
  func.func @transform_8(%arg0: i32) -> (i32, i32) {
    %c0_i32 = arith.constant 0 : i32
    %c0_i32_0 = arith.constant 0 : i32
    %c0_i32_1 = arith.constant 0 : i32
    return %c0_i32, %c0_i32_0 : i32, i32
  }
  func.func @transform_9(%arg0: i32) -> (i32, i32, i32) {
    %c0_i32 = arith.constant 0 : i32
    %c0_i32_0 = arith.constant 0 : i32
    %c0_i32_1 = arith.constant 0 : i32
    return %arg0, %c0_i32, %c0_i32_0 : i32, i32, i32
  }
}

</mosaic_0001>

<llo_original>
// kernel: tpu_custom_call.1
$region0: #{tpu_custom_call.1}
  #allocation0 [shape = 'u32[]', space=smem, size = 0x4, offset = 0x4, fixed_abs, tag = 'smem constant byte address 0x4 - core index']
  #allocation1 [shape = 'u32[144,128]{1,0:T(1,128)}', space=vmem, size = 0x12000, scoped, tag = 'internal scratch']
  %s0 = inlined_call_operand.vmem [shape: f32[2,4,64], index: 0, kind: input, shape index: {}]
  %s1 = inlined_call_operand.vmem [shape: f32[32,4], index: 1, kind: input, shape index: {}]
  %s2 = inlined_call_operand.vmem [shape: f32[32,1], index: 2, kind: input, shape index: {}]
  %s3 = inlined_call_operand.vmem [shape: f32[32,16], index: 3, kind: input, shape index: {}]
  %s4 = inlined_call_operand.vmem [shape: f32[32,1], index: 4, kind: input, shape index: {}]
  %s5 = inlined_call_operand.vmem [shape: f32[32,16], index: 5, kind: input, shape index: {}]
  %s6 = inlined_call_operand.vmem [shape: f32[32,1], index: 6, kind: input, shape index: {}]
  %s7 = inlined_call_operand.vmem [shape: f32[4,32], index: 7, kind: input, shape index: {}]
  %s8 = inlined_call_operand.vmem [shape: f32[4,32], index: 8, kind: input, shape index: {}]
  %s9 = inlined_call_operand.hbm [shape: f32[2,4,64], index: 9, kind: output, shape index: {}]
  %s10 = sld [smem:[#allocation0]]
  $region69: #{tpu_custom_call.1} parent=0
    _
  %s12 = ssub.s32 1, %s10
  %s13 = scalar_select 0, %s12, %s10
  $region1: #{tpu_custom_call.1} parent=0
    #allocation2 [shape = 'u8[4096]{0}', space=vmem, size = 0x1000, scoped, tag = 'output window, operand 0']
    #allocation3 [shape = 's32[2]{0}', space=sflag, size = 0x8, scoped, tag = 'scoped memory for tpu_custom_call.1']
    %14 = vsyncpa [#allocation3], 0
    %s15 = scalar_lea.sflag [#allocation3], 1
    %16 = vsyncpa %s15, 0
    loop: start=0, step=1, limit=4
    $region2: #{tpu_custom_call.1} parent=1 // loop_pre_header
      _
    $region3: #{tpu_custom_call.1} parent=1 // loop_header
      %s18 = sphi 0, %s22
      %p19 = scmp.ge.s32.totalorder %s18, 4
      %s28 = sphi 0, %s30
      %s31 = sphi 0, %s28
      %s32 = sphi 0, %s31
      %s48 = sphi 0, %s32
      %s52 = sphi 0, %s52
      %s54 = sphi 0, %s52
      %s55 = sphi 0, %s54
      %s69 = sphi 0, %s55
      %s73 = sphi 0, %s73
      %s75 = sphi 0, %s73
      %s76 = sphi 0, %s75
      %s90 = sphi 0, %s76
      %s94 = sphi 0, %s94
      %s96 = sphi 0, %s94
      %s97 = sphi 0, %s96
      %s111 = sphi 0, %s97
      %s115 = sphi 0, %s115
      %s117 = sphi 0, %s115
      %s118 = sphi 0, %s117
      %s132 = sphi 0, %s118
      %s136 = sphi 0, %s136
      %s138 = sphi 0, %s136
      %s139 = sphi 0, %s138
      %s153 = sphi 0, %s139
      %s157 = sphi 0, %s157
      %s159 = sphi 0, %s157
      %s160 = sphi 0, %s159
      %s174 = sphi 0, %s160
      %s178 = sphi 0, %s178
      %s180 = sphi 0, %s178
      %s181 = sphi 0, %s180
      %s195 = sphi 0, %s181
      %s199 = sphi 0, %s199
      %s201 = sphi 0, %s199
      %s202 = sphi 0, %s201
      %s216 = sphi 0, %s202
      %s222 = sphi 0, %s224
      %s225 = sphi 0, %s222
      %s226 = sphi 0, %s225
      %s242 = sphi 0, %s226
    $region4: #{tpu_custom_call.1} parent=1 // loop_header_branch
      %21 = sbr.rel (%p19) target = $region8
    $region5: #{tpu_custom_call.1} parent=1 // loop_body
      %s23 = ssub.s32 %s18, 1
      %s24 = ssub.s32 %s18, 2
      %s25 = sadd.s32 %s18, 1
      %s26 = ssub.s32 %s18, %s25
      %p27 = scmp.eq.s32.totalorder %s26, 0
      %s29 = sadd.s32 %s28, 1
      %s30 = scalar_select %p27, %s28, %s29
      %p33 = pneg %p27
      %p34 = scmp.eq.s32.totalorder %s18, 1
      %p35 = por %p33, %p34
      %p36 = scmp.ne.s32.totalorder %s28, %s31
      %p37 = scmp.eq.s32.totalorder %s18, 0
      %p38 = por %p36, %p37
      %p39 = scmp.ne.s32.totalorder %s28, %s31
      %p40 = scmp.eq.s32.totalorder %s23, 1
      %p41 = por %p39, %p40
      %p42 = scmp.ne.s32.totalorder %s31, %s32
      %p43 = scmp.eq.s32.totalorder %s23, 0
      %p44 = por %p42, %p43
      %p45 = scmp.ne.s32.totalorder %s31, %s32
      %p46 = scmp.eq.s32.totalorder %s24, 1
      %p47 = por %p45, %p46
      %p49 = scmp.ne.s32.totalorder %s32, %s48
      %p50 = scmp.eq.s32.totalorder %s24, 0
      %p51 = por %p49, %p50
      %s53 = sadd.s32 %s52, 1
      %p56 = scmp.eq.s32.totalorder %s18, 1
      %p57 = scmp.ne.s32.totalorder %s52, %s54
      %p58 = scmp.eq.s32.totalorder %s18, 0
      %p59 = por %p57, %p58
      %p60 = scmp.ne.s32.totalorder %s52, %s54
      %p61 = scmp.eq.s32.totalorder %s23, 1
      %p62 = por %p60, %p61
      %p63 = scmp.ne.s32.totalorder %s54, %s55
      %p64 = scmp.eq.s32.totalorder %s23, 0
      %p65 = por %p63, %p64
      %p66 = scmp.ne.s32.totalorder %s54, %s55
      %p67 = scmp.eq.s32.totalorder %s24, 1
      %p68 = por %p66, %p67
      %p70 = scmp.ne.s32.totalorder %s55, %s69
      %p71 = scmp.eq.s32.totalorder %s24, 0
      %p72 = por %p70, %p71
      %s74 = sadd.s32 %s73, 1
      %p77 = scmp.eq.s32.totalorder %s18, 1
      %p78 = scmp.ne.s32.totalorder %s73, %s75
      %p79 = scmp.eq.s32.totalorder %s18, 0
      %p80 = por %p78, %p79
      %p81 = scmp.ne.s32.totalorder %s73, %s75
      %p82 = scmp.eq.s32.totalorder %s23, 1
      %p83 = por %p81, %p82
      %p84 = scmp.ne.s32.totalorder %s75, %s76
      %p85 = scmp.eq.s32.totalorder %s23, 0
      %p86 = por %p84, %p85
      %p87 = scmp.ne.s32.totalorder %s75, %s76
      %p88 = scmp.eq.s32.totalorder %s24, 1
      %p89 = por %p87, %p88
      %p91 = scmp.ne.s32.totalorder %s76, %s90
      %p92 = scmp.eq.s32.totalorder %s24, 0
      %p93 = por %p91, %p92
      %s95 = sadd.s32 %s94, 1
      %p98 = scmp.eq.s32.totalorder %s18, 1
      %p99 = scmp.ne.s32.totalorder %s94, %s96
      %p100 = scmp.eq.s32.totalorder %s18, 0
      %p101 = por %p99, %p100
      %p102 = scmp.ne.s32.totalorder %s94, %s96
      %p103 = scmp.eq.s32.totalorder %s23, 1
      %p104 = por %p102, %p103
      %p105 = scmp.ne.s32.totalorder %s96, %s97
      %p106 = scmp.eq.s32.totalorder %s23, 0
      %p107 = por %p105, %p106
      %p108 = scmp.ne.s32.totalorder %s96, %s97
      %p109 = scmp.eq.s32.totalorder %s24, 1
      %p110 = por %p108, %p109
      %p112 = scmp.ne.s32.totalorder %s97, %s111
      %p113 = scmp.eq.s32.totalorder %s24, 0
      %p114 = por %p112, %p113
      %s116 = sadd.s32 %s115, 1
      %p119 = scmp.eq.s32.totalorder %s18, 1
      %p120 = scmp.ne.s32.totalorder %s115, %s117
      %p121 = scmp.eq.s32.totalorder %s18, 0
      %p122 = por %p120, %p121
      %p123 = scmp.ne.s32.totalorder %s115, %s117
      %p124 = scmp.eq.s32.totalorder %s23, 1
      %p125 = por %p123, %p124
      %p126 = scmp.ne.s32.totalorder %s117, %s118
      %p127 = scmp.eq.s32.totalorder %s23, 0
      %p128 = por %p126, %p127
      %p129 = scmp.ne.s32.totalorder %s117, %s118
      %p130 = scmp.eq.s32.totalorder %s24, 1
      %p131 = por %p129, %p130
      %p133 = scmp.ne.s32.totalorder %s118, %s132
      %p134 = scmp.eq.s32.totalorder %s24, 0
      %p135 = por %p133, %p134
      %s137 = sadd.s32 %s136, 1
      %p140 = scmp.eq.s32.totalorder %s18, 1
      %p141 = scmp.ne.s32.totalorder %s136, %s138
      %p142 = scmp.eq.s32.totalorder %s18, 0
      %p143 = por %p141, %p142
      %p144 = scmp.ne.s32.totalorder %s136, %s138
      %p145 = scmp.eq.s32.totalorder %s23, 1
      %p146 = por %p144, %p145
      %p147 = scmp.ne.s32.totalorder %s138, %s139
      %p148 = scmp.eq.s32.totalorder %s23, 0
      %p149 = por %p147, %p148
      %p150 = scmp.ne.s32.totalorder %s138, %s139
      %p151 = scmp.eq.s32.totalorder %s24, 1
      %p152 = por %p150, %p151
      %p154 = scmp.ne.s32.totalorder %s139, %s153
      %p155 = scmp.eq.s32.totalorder %s24, 0
      %p156 = por %p154, %p155
      %s158 = sadd.s32 %s157, 1
      %p161 = scmp.eq.s32.totalorder %s18, 1
      %p162 = scmp.ne.s32.totalorder %s157, %s159
      %p163 = scmp.eq.s32.totalorder %s18, 0
      %p164 = por %p162, %p163
      %p165 = scmp.ne.s32.totalorder %s157, %s159
      %p166 = scmp.eq.s32.totalorder %s23, 1
      %p167 = por %p165, %p166
      %p168 = scmp.ne.s32.totalorder %s159, %s160
      %p169 = scmp.eq.s32.totalorder %s23, 0
      %p170 = por %p168, %p169
      %p171 = scmp.ne.s32.totalorder %s159, %s160
      %p172 = scmp.eq.s32.totalorder %s24, 1
      %p173 = por %p171, %p172
      %p175 = scmp.ne.s32.totalorder %s160, %s174
      %p176 = scmp.eq.s32.totalorder %s24, 0
      %p177 = por %p175, %p176
      %s179 = sadd.s32 %s178, 1
      %p182 = scmp.eq.s32.totalorder %s18, 1
      %p183 = scmp.ne.s32.totalorder %s178, %s180
      %p184 = scmp.eq.s32.totalorder %s18, 0
      %p185 = por %p183, %p184
      %p186 = scmp.ne.s32.totalorder %s178, %s180
      %p187 = scmp.eq.s32.totalorder %s23, 1
      %p188 = por %p186, %p187
      %p189 = scmp.ne.s32.totalorder %s180, %s181
      %p190 = scmp.eq.s32.totalorder %s23, 0
      %p191 = por %p189, %p190
      %p192 = scmp.ne.s32.totalorder %s180, %s181
      %p193 = scmp.eq.s32.totalorder %s24, 1
      %p194 = por %p192, %p193
      %p196 = scmp.ne.s32.totalorder %s181, %s195
      %p197 = scmp.eq.s32.totalorder %s24, 0
      %p198 = por %p196, %p197
      %s200 = sadd.s32 %s199, 1
      %p203 = scmp.eq.s32.totalorder %s18, 1
      %p204 = scmp.ne.s32.totalorder %s199, %s201
      %p205 = scmp.eq.s32.totalorder %s18, 0
      %p206 = por %p204, %p205
      %p207 = scmp.ne.s32.totalorder %s199, %s201
      %p208 = scmp.eq.s32.totalorder %s23, 1
      %p209 = por %p207, %p208
      %p210 = scmp.ne.s32.totalorder %s201, %s202
      %p211 = scmp.eq.s32.totalorder %s23, 0
      %p212 = por %p210, %p211
      %p213 = scmp.ne.s32.totalorder %s201, %s202
      %p214 = scmp.eq.s32.totalorder %s24, 1
      %p215 = por %p213, %p214
      %p217 = scmp.ne.s32.totalorder %s202, %s216
      %p218 = scmp.eq.s32.totalorder %s24, 0
      %p219 = por %p217, %p218
      %s220 = ssub.s32 %s18, %s25
      %p221 = scmp.eq.s32.totalorder %s220, 0
      %s223 = sadd.s32 %s222, 1
      %s224 = scalar_select %p221, %s222, %s223
      %p227 = pneg %p221
      %p228 = scmp.eq.s32.totalorder %s18, 1
      %p229 = por %p227, %p228
      %p230 = scmp.ne.s32.totalorder %s222, %s225
      %p231 = scmp.eq.s32.totalorder %s18, 0
      %p232 = por %p230, %p231
      %p233 = scmp.ne.s32.totalorder %s222, %s225
      %p234 = scmp.eq.s32.totalorder %s23, 1
      %p235 = por %p233, %p234
      %p236 = scmp.ne.s32.totalorder %s225, %s226
      %p237 = scmp.eq.s32.totalorder %s23, 0
      %p238 = por %p236, %p237
      %p239 = scmp.ne.s32.totalorder %s225, %s226
      %p240 = scmp.eq.s32.totalorder %s24, 1
      %p241 = por %p239, %p240
      %p243 = scmp.ne.s32.totalorder %s226, %s242
      %p244 = scmp.eq.s32.totalorder %s24, 0
      %p245 = por %p243, %p244
      %p246 = scmp.le.s32.totalorder 1, %s18
      %p247 = scmp.lt.s32.totalorder %s18, 3
      %p248 = pnand %p246, %p247
      %p249 = pneg %p248
      // Predicated region
      $region9: #{tpu_custom_call.1} parent=5 // pred_check
        _
      $region10: #{tpu_custom_call.1} parent=5 // pred_check_branch
        %251 = sbr.rel (%p248) target = $region12
      $region11: #{tpu_custom_call.1} parent=5 // pred_region
        %s252 = ssub.s32 %s18, 1
        // Predicated region
        $region13: #{tpu_custom_call.1} parent=11 // pred_check
          %p253 = pneg %p65
        $region14: #{tpu_custom_call.1} parent=11 // pred_check_branch
          %255 = sbr.rel (%p253) target = $region16
        $region15: #{tpu_custom_call.1} parent=11 // pred_region
          _
        $region16: #{tpu_custom_call.1} parent=11 // pred_fallthru
          _
        // Predicated region
        $region17: #{tpu_custom_call.1} parent=11 // pred_check
          %p256 = pneg %p86
        $region18: #{tpu_custom_call.1} parent=11 // pred_check_branch
          %258 = sbr.rel (%p256) target = $region20
        $region19: #{tpu_custom_call.1} parent=11 // pred_region
          _
        $region20: #{tpu_custom_call.1} parent=11 // pred_fallthru
          _
        // Predicated region
        $region21: #{tpu_custom_call.1} parent=11 // pred_check
          %p259 = pneg %p107
        $region22: #{tpu_custom_call.1} parent=11 // pred_check_branch
          %261 = sbr.rel (%p259) target = $region24
        $region23: #{tpu_custom_call.1} parent=11 // pred_region
          _
        $region24: #{tpu_custom_call.1} parent=11 // pred_fallthru
          _
        // Predicated region
        $region25: #{tpu_custom_call.1} parent=11 // pred_check
          %p262 = pneg %p128
        $region26: #{tpu_custom_call.1} parent=11 // pred_check_branch
          %264 = sbr.rel (%p262) target = $region28
        $region27: #{tpu_custom_call.1} parent=11 // pred_region
          _
        $region28: #{tpu_custom_call.1} parent=11 // pred_fallthru
          _
        // Predicated region
        $region29: #{tpu_custom_call.1} parent=11 // pred_check
          %p265 = pneg %p149
        $region30: #{tpu_custom_call.1} parent=11 // pred_check_branch
          %267 = sbr.rel (%p265) target = $region32
        $region31: #{tpu_custom_call.1} parent=11 // pred_region
          _
        $region32: #{tpu_custom_call.1} parent=11 // pred_fallthru
          _
        // Predicated region
        $region33: #{tpu_custom_call.1} parent=11 // pred_check
          %p268 = pneg %p170
        $region34: #{tpu_custom_call.1} parent=11 // pred_check_branch
          %270 = sbr.rel (%p268) target = $region36
        $region35: #{tpu_custom_call.1} parent=11 // pred_region
          _
        $region36: #{tpu_custom_call.1} parent=11 // pred_fallthru
          _
        // Predicated region
        $region37: #{tpu_custom_call.1} parent=11 // pred_check
          %p271 = pneg %p191
        $region38: #{tpu_custom_call.1} parent=11 // pred_check_branch
          %273 = sbr.rel (%p271) target = $region40
        $region39: #{tpu_custom_call.1} parent=11 // pred_region
          _
        $region40: #{tpu_custom_call.1} parent=11 // pred_fallthru
          _
        // Predicated region
        $region41: #{tpu_custom_call.1} parent=11 // pred_check
          %p274 = pneg %p212
        $region42: #{tpu_custom_call.1} parent=11 // pred_check_branch
          %276 = sbr.rel (%p274) target = $region44
        $region43: #{tpu_custom_call.1} parent=11 // pred_region
          _
        $region44: #{tpu_custom_call.1} parent=11 // pred_fallthru
          _
      $region12: #{tpu_custom_call.1} parent=5 // pred_fallthru
        _
      %p277 = scmp.lt.s32.totalorder %s18, 2
      // Predicated region
      $region45: #{tpu_custom_call.1} parent=5 // pred_check
        %p278 = pneg %p277
      $region46: #{tpu_custom_call.1} parent=5 // pred_check_branch
        %280 = sbr.rel (%p278) target = $region48
      $region47: #{tpu_custom_call.1} parent=5 // pred_region
        // Predicated region
        $region49: #{tpu_custom_call.1} parent=47 // pred_check
          %p281 = pneg %p38
        $region50: #{tpu_custom_call.1} parent=47 // pred_check_branch
          %283 = sbr.rel (%p281) target = $region52
        $region51: #{tpu_custom_call.1} parent=47 // pred_region
          %p284 = scmp.lt.s32.totalorder %s18, 1
          %s285 = scalar_select %p284, %s18, 1
          %s286 = smul.addr %s285, 4
          %s287 = scalar_lea.vmem %s0, %s286
        $region52: #{tpu_custom_call.1} parent=47 // pred_fallthru
          _
      $region48: #{tpu_custom_call.1} parent=5 // pred_fallthru
        _
      %p288 = scmp.le.s32.totalorder 1, %s18
      %p289 = scmp.lt.s32.totalorder %s18, 3
      %p290 = pnand %p288, %p289
      %p291 = pneg %p290
      // Predicated region
      $region53: #{tpu_custom_call.1} parent=5 // pred_check
        _
      $region54: #{tpu_custom_call.1} parent=5 // pred_check_branch
        %293 = sbr.rel (%p290) target = $region56
      $region55: #{tpu_custom_call.1} parent=5 // pred_region
        %s294 = ssub.s32 %s18, 1
        %p295 = scmp.lt.s32.totalorder %s23, 1
        %s296 = scalar_select %p295, %s23, 1
        %s297 = smul.addr %s296, 4
        %s298 = scalar_lea.vmem %s0, %s297
        %p299 = pneg %p44
        %p300 = pneg %p41
        %p301 = pneg %p65
        %p302 = pneg %p62
        %p303 = pneg %p86
        %p304 = pneg %p83
        %p305 = pneg %p107
        %p306 = pneg %p104
        %p307 = pneg %p128
        %p308 = pneg %p125
        %p309 = pneg %p149
        %p310 = pneg %p146
        %p311 = pneg %p170
        %p312 = pneg %p167
        %p313 = pneg %p191
        %p314 = pneg %p188
        %p315 = pneg %p212
        %p316 = pneg %p209
        %p317 = pneg %p238
        %p318 = pneg %p235
        %s319 = sand.u32 %s225, 1
        %s320 = scalar_lea.sflag [#allocation3], %s319
        %s321 = sand.u32 %s225, 1
        %s322 = smul.addr %s321, 4
        %s323 = scalar_lea.vmem [#allocation2], %s322
        %p324 = scmp.lt.s32.totalorder %s23, 1
        %s325 = scalar_select %p324, %s23, 1
        %s326 = smul.addr %s325, 4
        %s327 = scalar_lea.vmem %s0, %s326
        %v328 = vld [vmem:[%s327] sm:$0xf]
        %v329 = vld [vmem:[%s1] sm:$0xff]
        %v330 = vld [vmem:[%s1 + $0x8] sm:$0xff]
        %v331 = vld [vmem:[%s1 + $0x10] sm:$0xff]
        %v332 = vld [vmem:[%s1 + $0x18] sm:$0xff]
        %v333 = vld [vmem:[%s2] sm:$0xff]
        %v334 = vld [vmem:[%s2 + $0x8] sm:$0xff]
        %v335 = vld [vmem:[%s2 + $0x10] sm:$0xff]
        %v336 = vld [vmem:[%s2 + $0x18] sm:$0xff]
        %338 = vset.pattern.permute.xlu0 0
        %339 = vperm.xlu0 %338, %v333
        %v340 = vpop.permute.xlu0 %339
        %343 = vset.pattern.permute.xlu0 0
        %344 = vperm.xlu0 %343, %v334
        %v345 = vpop.permute.xlu0 %344
        %348 = vset.pattern.permute.xlu0 0
        %349 = vperm.xlu0 %348, %v335
        %v350 = vpop.permute.xlu0 %349
        %353 = vset.pattern.permute.xlu0 0
        %354 = vperm.xlu0 %353, %v336
        %v355 = vpop.permute.xlu0 %354
        %vm357 = vcmask 31744
        %v359 = vsel %vm357, %v329, 0
        %v362 = vsel %vm357, %v330, 0
        %v365 = vsel %vm357, %v331, 0
        %v368 = vsel %vm357, %v332, 0
        %vm370 = vcmask 1043456
        %v372 = vsel %vm370, %v328, 0
        %374 = vmatprep.subr.mxu0 0.0
        %375 = vmatpush1.msra.mxu0 %v372
        %376 = vmatprep.subr.mxu0 0.0
        %377 = vmatpush1.msra.mxu0 0.0
        %378 = vmatprep.subr.mxu0 0.0
        %379 = vmatpush1.msra.mxu0 0.0
        %380 = vmatprep.subr.mxu0 0.0
        %381 = vmatpush1.msra.mxu0 0.0
        %382 = vmatprep.subr.mxu0 0.0
        %383 = vmatpush1.msra.mxu0 0.0
        %384 = vmatprep.subr.mxu0 0.0
        %385 = vmatpush1.msra.mxu0 0.0
        %386 = vmatprep.subr.mxu0 0.0
        %387 = vmatpush1.msra.mxu0 0.0
        %388 = vmatprep.subr.mxu0 0.0
        %389 = vmatpush1.msra.mxu0 0.0
        %390 = vmatprep.subr.mxu0 0.0
        %391 = vmatpush1.msra.mxu0 0.0
        %392 = vmatprep.subr.mxu0 0.0
        %393 = vmatpush1.msra.mxu0 0.0
        %394 = vmatprep.subr.mxu0 0.0
        %395 = vmatpush1.msra.mxu0 0.0
        %396 = vmatprep.subr.mxu0 0.0
        %397 = vmatpush1.msra.mxu0 0.0
        %398 = vmatprep.subr.mxu0 0.0
        %399 = vmatpush1.msra.mxu0 0.0
        %400 = vmatprep.subr.mxu0 0.0
        %401 = vmatpush1.msra.mxu0 0.0
        %402 = vmatprep.subr.mxu0 0.0
        %403 = vmatpush1.msra.mxu0 0.0
        %404 = vmatprep.subr.mxu0 0.0
        %405 = vmatpush1.msra.mxu0 0.0
        %406 = vmatprep.subr.mxu0 0.0
        %407 = vmatpush1.msra.mxu0 0.0
        %408 = vmatprep.subr.mxu0 0.0
        %409 = vmatpush1.msra.mxu0 0.0
        %410 = vmatprep.subr.mxu0 0.0
        %411 = vmatpush1.msra.mxu0 0.0
        %412 = vmatprep.subr.mxu0 0.0
        %413 = vmatpush1.msra.mxu0 0.0
        %414 = vmatprep.subr.mxu0 0.0
        %415 = vmatpush1.msra.mxu0 0.0
        %416 = vmatprep.subr.mxu0 0.0
        %417 = vmatpush1.msra.mxu0 0.0
        %418 = vmatprep.subr.mxu0 0.0
        %419 = vmatpush1.msra.mxu0 0.0
        %420 = vmatprep.subr.mxu0 0.0
        %421 = vmatpush1.msra.mxu0 0.0
        %422 = vmatprep.subr.mxu0 0.0
        %423 = vmatpush1.msra.mxu0 0.0
        %424 = vmatprep.subr.mxu0 0.0
        %425 = vmatpush1.msra.mxu0 0.0
        %426 = vmatprep.subr.mxu0 0.0
        %427 = vmatpush1.msra.mxu0 0.0
        %428 = vmatprep.subr.mxu0 0.0
        %429 = vmatpush1.msra.mxu0 0.0
        %430 = vmatprep.subr.mxu0 0.0
        %431 = vmatpush1.msra.mxu0 0.0
        %432 = vmatprep.subr.mxu0 0.0
        %433 = vmatpush1.msra.mxu0 0.0
        %434 = vmatprep.subr.mxu0 0.0
        %435 = vmatpush1.msra.mxu0 0.0
        %436 = vmatprep.subr.mxu0 0.0
        %437 = vmatpush1.msra.mxu0 0.0
        %438 = vmatprep.mubr.f32.mxu0 0.0
        %439 = vmatmul.mubr.f32.gmra.mrb[0].mxu0 %v359
        %v440 = vpop.f32.mrb[0].mxu0
        %v441 = vadd.f32 %v340, %v440
        %v442 = vpop.f32.mrb[0].mxu0
        %443 = vmatprep.mubr.f32.mxu0 0.0
        %444 = vmatmul.mubr.f32.gmra.mrb[0].mxu0 %v362
        %v445 = vpop.f32.mrb[0].mxu0
        %v446 = vadd.f32 %v345, %v445
        %v447 = vpop.f32.mrb[0].mxu0
        %448 = vmatprep.mubr.f32.mxu0 0.0
        %449 = vmatmul.mubr.f32.gmra.mrb[0].mxu0 %v365
        %v450 = vpop.f32.mrb[0].mxu0
        %v451 = vadd.f32 %v350, %v450
        %v452 = vpop.f32.mrb[0].mxu0
        %453 = vmatprep.mubr.f32.mxu0 0.0
        %454 = vmatmul.mubr.f32.gmra.mrb[0].mxu0 %v368
        %v455 = vpop.f32.mrb[0].mxu0
        %v456 = vadd.f32 %v355, %v455
        %v457 = vpop.f32.mrb[0].mxu0
        %458 = vdwg.mxu0
        %v459 = vmax.f32 %v441, 0.0
        %v460 = vmax.f32 %v446, 0.0
        %v461 = vmax.f32 %v451, 0.0
        %v462 = vmax.f32 %v456, 0.0
        %v463 = vld [vmem:[%s3] sm:$0xff]
        %v464 = vld [vmem:[%s3 + $0x8] sm:$0xff]
        %v465 = vld [vmem:[%s3 + $0x10] sm:$0xff]
        %v466 = vld [vmem:[%s3 + $0x18] sm:$0xff]
        %v467 = vld [vmem:[%s4] sm:$0xff]
        %v468 = vld [vmem:[%s4 + $0x8] sm:$0xff]
        %v469 = vld [vmem:[%s4 + $0x10] sm:$0xff]
        %v470 = vld [vmem:[%s4 + $0x18] sm:$0xff]
        %472 = vset.pattern.permute.xlu0 0
        %473 = vperm.xlu0 %472, %v467
        %v474 = vpop.permute.xlu0 %473
        %477 = vset.pattern.permute.xlu0 0
        %478 = vperm.xlu0 %477, %v468
        %v479 = vpop.permute.xlu0 %478
        %482 = vset.pattern.permute.xlu0 0
        %483 = vperm.xlu0 %482, %v469
        %v484 = vpop.permute.xlu0 %483
        %487 = vset.pattern.permute.xlu0 0
        %488 = vperm.xlu0 %487, %v470
        %v489 = vpop.permute.xlu0 %488
        %vm491 = vcmask 130048
        %v493 = vsel %vm491, %v463, 0
        %v496 = vsel %vm491, %v464, 0
        %v499 = vsel %vm491, %v465, 0
        %v502 = vsel %vm491, %v466, 0
        %504 = vmatprep.subr.mxu0 0.0
        %505 = vmatpush1.msra.mxu0 %v459
        %506 = vmatprep.subr.mxu0 0.0
        %507 = vmatpush1.msra.mxu0 %v460
        %508 = vmatprep.subr.mxu0 0.0
        %509 = vmatpush1.msra.mxu0 0.0
        %510 = vmatprep.subr.mxu0 0.0
        %511 = vmatpush1.msra.mxu0 0.0
        %512 = vmatprep.subr.mxu0 0.0
        %513 = vmatpush1.msra.mxu0 0.0
        %514 = vmatprep.subr.mxu0 0.0
        %515 = vmatpush1.msra.mxu0 0.0
        %516 = vmatprep.subr.mxu0 0.0
        %517 = vmatpush1.msra.mxu0 0.0
        %518 = vmatprep.subr.mxu0 0.0
        %519 = vmatpush1.msra.mxu0 0.0
        %520 = vmatprep.subr.mxu0 0.0
        %521 = vmatpush1.msra.mxu0 0.0
        %522 = vmatprep.subr.mxu0 0.0
        %523 = vmatpush1.msra.mxu0 0.0
        %524 = vmatprep.subr.mxu0 0.0
        %525 = vmatpush1.msra.mxu0 0.0
        %526 = vmatprep.subr.mxu0 0.0
        %527 = vmatpush1.msra.mxu0 0.0
        %528 = vmatprep.subr.mxu0 0.0
        %529 = vmatpush1.msra.mxu0 0.0
        %530 = vmatprep.subr.mxu0 0.0
        %531 = vmatpush1.msra.mxu0 0.0
        %532 = vmatprep.subr.mxu0 0.0
        %533 = vmatpush1.msra.mxu0 0.0
        %534 = vmatprep.subr.mxu0 0.0
        %535 = vmatpush1.msra.mxu0 0.0
        %536 = vmatprep.subr.mxu0 0.0
        %537 = vmatpush1.msra.mxu0 0.0
        %538 = vmatprep.subr.mxu0 0.0
        %539 = vmatpush1.msra.mxu0 0.0
        %540 = vmatprep.subr.mxu0 0.0
        %541 = vmatpush1.msra.mxu0 0.0
        %542 = vmatprep.subr.mxu0 0.0
        %543 = vmatpush1.msra.mxu0 0.0
        %544 = vmatprep.subr.mxu0 0.0
        %545 = vmatpush1.msra.mxu0 0.0
        %546 = vmatprep.subr.mxu0 0.0
        %547 = vmatpush1.msra.mxu0 0.0
        %548 = vmatprep.subr.mxu0 0.0
        %549 = vmatpush1.msra.mxu0 0.0
        %550 = vmatprep.subr.mxu0 0.0
        %551 = vmatpush1.msra.mxu0 0.0
        %552 = vmatprep.subr.mxu0 0.0
        %553 = vmatpush1.msra.mxu0 0.0
        %554 = vmatprep.subr.mxu0 0.0
        %555 = vmatpush1.msra.mxu0 0.0
        %556 = vmatprep.subr.mxu0 0.0
        %557 = vmatpush1.msra.mxu0 0.0
        %558 = vmatprep.subr.mxu0 0.0
        %559 = vmatpush1.msra.mxu0 0.0
        %560 = vmatprep.subr.mxu0 0.0
        %561 = vmatpush1.msra.mxu0 0.0
        %562 = vmatprep.subr.mxu0 0.0
        %563 = vmatpush1.msra.mxu0 0.0
        %564 = vmatprep.subr.mxu0 0.0
        %565 = vmatpush1.msra.mxu0 0.0
        %566 = vmatprep.subr.mxu0 0.0
        %567 = vmatpush1.msra.mxu0 0.0
        %568 = vmatprep.mubr.f32.mxu0 0.0
        %569 = vmatmul.mubr.f32.gmra.mrb[0].mxu0 %v493
        %v570 = vpop.f32.mrb[0].mxu0
        %v571 = vadd.f32 %v474, %v570
        %v572 = vpop.f32.mrb[0].mxu0
        %573 = vmatprep.mubr.f32.mxu0 0.0
        %574 = vmatmul.mubr.f32.gmra.mrb[0].mxu0 %v496
        %v575 = vpop.f32.mrb[0].mxu0
        %v576 = vadd.f32 %v479, %v575
        %v577 = vpop.f32.mrb[0].mxu0
        %578 = vmatprep.mubr.f32.mxu0 0.0
        %579 = vmatmul.mubr.f32.gmra.mrb[0].mxu0 %v499
        %v580 = vpop.f32.mrb[0].mxu0
        %v581 = vadd.f32 %v484, %v580
        %v582 = vpop.f32.mrb[0].mxu0
        %583 = vmatprep.mubr.f32.mxu0 0.0
        %584 = vmatmul.mubr.f32.gmra.mrb[0].mxu0 %v502
        %v585 = vpop.f32.mrb[0].mxu0
        %v586 = vadd.f32 %v489, %v585
        %v587 = vpop.f32.mrb[0].mxu0
        %588 = vdwg.mxu0
        %v589 = vld [vmem:[%s5] sm:$0xff]
        %v590 = vld [vmem:[%s5 + $0x8] sm:$0xff]
        %v591 = vld [vmem:[%s5 + $0x10] sm:$0xff]
        %v592 = vld [vmem:[%s5 + $0x18] sm:$0xff]
        %v593 = vld [vmem:[%s6] sm:$0xff]
        %v594 = vld [vmem:[%s6 + $0x8] sm:$0xff]
        %v595 = vld [vmem:[%s6 + $0x10] sm:$0xff]
        %v596 = vld [vmem:[%s6 + $0x18] sm:$0xff]
        %598 = vset.pattern.permute.xlu0 0
        %599 = vperm.xlu0 %598, %v593
        %v600 = vpop.permute.xlu0 %599
        %603 = vset.pattern.permute.xlu0 0
        %604 = vperm.xlu0 %603, %v594
        %v605 = vpop.permute.xlu0 %604
        %608 = vset.pattern.permute.xlu0 0
        %609 = vperm.xlu0 %608, %v595
        %v610 = vpop.permute.xlu0 %609
        %613 = vset.pattern.permute.xlu0 0
        %614 = vperm.xlu0 %613, %v596
        %v615 = vpop.permute.xlu0 %614
        %v618 = vsel %vm491, %v589, 0
        %v621 = vsel %vm491, %v590, 0
        %v624 = vsel %vm491, %v591, 0
        %v627 = vsel %vm491, %v592, 0
        %629 = vmatprep.subr.mxu0 0.0
        %630 = vmatpush1.msra.mxu0 %v461
        %631 = vmatprep.subr.mxu0 0.0
        %632 = vmatpush1.msra.mxu0 %v462
        %633 = vmatprep.subr.mxu0 0.0
        %634 = vmatpush1.msra.mxu0 0.0
        %635 = vmatprep.subr.mxu0 0.0
        %636 = vmatpush1.msra.mxu0 0.0
        %637 = vmatprep.subr.mxu0 0.0
        %638 = vmatpush1.msra.mxu0 0.0
        %639 = vmatprep.subr.mxu0 0.0
        %640 = vmatpush1.msra.mxu0 0.0
        %641 = vmatprep.subr.mxu0 0.0
        %642 = vmatpush1.msra.mxu0 0.0
        %643 = vmatprep.subr.mxu0 0.0
        %644 = vmatpush1.msra.mxu0 0.0
        %645 = vmatprep.subr.mxu0 0.0
        %646 = vmatpush1.msra.mxu0 0.0
        %647 = vmatprep.subr.mxu0 0.0
        %648 = vmatpush1.msra.mxu0 0.0
        %649 = vmatprep.subr.mxu0 0.0
        %650 = vmatpush1.msra.mxu0 0.0
        %651 = vmatprep.subr.mxu0 0.0
        %652 = vmatpush1.msra.mxu0 0.0
        %653 = vmatprep.subr.mxu0 0.0
        %654 = vmatpush1.msra.mxu0 0.0
        %655 = vmatprep.subr.mxu0 0.0
        %656 = vmatpush1.msra.mxu0 0.0
        %657 = vmatprep.subr.mxu0 0.0
        %658 = vmatpush1.msra.mxu0 0.0
        %659 = vmatprep.subr.mxu0 0.0
        %660 = vmatpush1.msra.mxu0 0.0
        %661 = vmatprep.subr.mxu0 0.0
        %662 = vmatpush1.msra.mxu0 0.0
        %663 = vmatprep.subr.mxu0 0.0
        %664 = vmatpush1.msra.mxu0 0.0
        %665 = vmatprep.subr.mxu0 0.0
        %666 = vmatpush1.msra.mxu0 0.0
        %667 = vmatprep.subr.mxu0 0.0
        %668 = vmatpush1.msra.mxu0 0.0
        %669 = vmatprep.subr.mxu0 0.0
        %670 = vmatpush1.msra.mxu0 0.0
        %671 = vmatprep.subr.mxu0 0.0
        %672 = vmatpush1.msra.mxu0 0.0
        %673 = vmatprep.subr.mxu0 0.0
        %674 = vmatpush1.msra.mxu0 0.0
        %675 = vmatprep.subr.mxu0 0.0
        %676 = vmatpush1.msra.mxu0 0.0
        %677 = vmatprep.subr.mxu0 0.0
        %678 = vmatpush1.msra.mxu0 0.0
        %679 = vmatprep.subr.mxu0 0.0
        %680 = vmatpush1.msra.mxu0 0.0
        %681 = vmatprep.subr.mxu0 0.0
        %682 = vmatpush1.msra.mxu0 0.0
        %683 = vmatprep.subr.mxu0 0.0
        %684 = vmatpush1.msra.mxu0 0.0
        %685 = vmatprep.subr.mxu0 0.0
        %686 = vmatpush1.msra.mxu0 0.0
        %687 = vmatprep.subr.mxu0 0.0
        %688 = vmatpush1.msra.mxu0 0.0
        %689 = vmatprep.subr.mxu0 0.0
        %690 = vmatpush1.msra.mxu0 0.0
        %691 = vmatprep.subr.mxu0 0.0
        %692 = vmatpush1.msra.mxu0 0.0
        %693 = vmatprep.mubr.f32.mxu0 0.0
        %694 = vmatmul.mubr.f32.gmra.mrb[0].mxu0 %v618
        %v695 = vpop.f32.mrb[0].mxu0
        %v696 = vadd.f32 %v600, %v695
        %v697 = vpop.f32.mrb[0].mxu0
        %698 = vmatprep.mubr.f32.mxu0 0.0
        %699 = vmatmul.mubr.f32.gmra.mrb[0].mxu0 %v621
        %v700 = vpop.f32.mrb[0].mxu0
        %v701 = vadd.f32 %v605, %v700
        %v702 = vpop.f32.mrb[0].mxu0
        %703 = vmatprep.mubr.f32.mxu0 0.0
        %704 = vmatmul.mubr.f32.gmra.mrb[0].mxu0 %v624
        %v705 = vpop.f32.mrb[0].mxu0
        %v706 = vadd.f32 %v610, %v705
        %v707 = vpop.f32.mrb[0].mxu0
        %708 = vmatprep.mubr.f32.mxu0 0.0
        %709 = vmatmul.mubr.f32.gmra.mrb[0].mxu0 %v627
        %v710 = vpop.f32.mrb[0].mxu0
        %v711 = vadd.f32 %v615, %v710
        %v712 = vpop.f32.mrb[0].mxu0
        %713 = vdwg.mxu0
        %vm714 = vcmask 523264
        %v715 = vsel %vm714, %v328, 0
        %v718 = vsel %vm714, %v696, 0
        %v721 = vsel %vm714, %v701, 0
        %v724 = vsel %vm714, %v706, 0
        %v727 = vsel %vm714, %v711, 0
        %729 = vmatprep.subr.mxu0 0.0
        %730 = vmatpush1.xpose.msra.mxu0 %v718
        %731 = vmatprep.subr.mxu0 0.0
        %732 = vmatpush1.xpose.msra.mxu0 %v721
        %733 = vmatprep.subr.mxu0 0.0
        %734 = vmatpush1.xpose.msra.mxu0 %v724
        %735 = vmatprep.subr.mxu0 0.0
        %736 = vmatpush1.xpose.msra.mxu0 %v727
        %737 = vmatprep.subr.mxu0 0.0
        %738 = vmatpush1.xpose.msra.mxu0 0.0
        %739 = vmatprep.subr.mxu0 0.0
        %740 = vmatpush1.xpose.msra.mxu0 0.0
        %741 = vmatprep.subr.mxu0 0.0
        %742 = vmatpush1.xpose.msra.mxu0 0.0
        %743 = vmatprep.subr.mxu0 0.0
        %744 = vmatpush1.xpose.msra.mxu0 0.0
        %745 = vmatprep.subr.mxu0 0.0
        %746 = vmatpush1.xpose.msra.mxu0 0.0
        %747 = vmatprep.subr.mxu0 0.0
        %748 = vmatpush1.xpose.msra.mxu0 0.0
        %749 = vmatprep.subr.mxu0 0.0
        %750 = vmatpush1.xpose.msra.mxu0 0.0
        %751 = vmatprep.subr.mxu0 0.0
        %752 = vmatpush1.xpose.msra.mxu0 0.0
        %753 = vmatprep.subr.mxu0 0.0
        %754 = vmatpush1.xpose.msra.mxu0 0.0
        %755 = vmatprep.subr.mxu0 0.0
        %756 = vmatpush1.xpose.msra.mxu0 0.0
        %757 = vmatprep.subr.mxu0 0.0
        %758 = vmatpush1.xpose.msra.mxu0 0.0
        %759 = vmatprep.subr.mxu0 0.0
        %760 = vmatpush1.xpose.msra.mxu0 0.0
        %761 = vmatprep.subr.mxu0 0.0
        %762 = vmatpush1.xpose.msra.mxu0 0.0
        %763 = vmatprep.subr.mxu0 0.0
        %764 = vmatpush1.xpose.msra.mxu0 0.0
        %765 = vmatprep.subr.mxu0 0.0
        %766 = vmatpush1.xpose.msra.mxu0 0.0
        %767 = vmatprep.subr.mxu0 0.0
        %768 = vmatpush1.xpose.msra.mxu0 0.0
        %769 = vmatprep.subr.mxu0 0.0
        %770 = vmatpush1.xpose.msra.mxu0 0.0
        %771 = vmatprep.subr.mxu0 0.0
        %772 = vmatpush1.xpose.msra.mxu0 0.0
        %773 = vmatprep.subr.mxu0 0.0
        %774 = vmatpush1.xpose.msra.mxu0 0.0
        %775 = vmatprep.subr.mxu0 0.0
        %776 = vmatpush1.xpose.msra.mxu0 0.0
        %777 = vmatprep.subr.mxu0 0.0
        %778 = vmatpush1.xpose.msra.mxu0 0.0
        %779 = vmatprep.subr.mxu0 0.0
        %780 = vmatpush1.xpose.msra.mxu0 0.0
        %781 = vmatprep.subr.mxu0 0.0
        %782 = vmatpush1.xpose.msra.mxu0 0.0
        %783 = vmatprep.subr.mxu0 0.0
        %784 = vmatpush1.xpose.msra.mxu0 0.0
        %785 = vmatprep.subr.mxu0 0.0
        %786 = vmatpush1.xpose.msra.mxu0 0.0
        %787 = vmatprep.subr.mxu0 0.0
        %788 = vmatpush1.xpose.msra.mxu0 0.0
        %789 = vmatprep.subr.mxu0 0.0
        %790 = vmatpush1.xpose.msra.mxu0 0.0
        %791 = vmatprep.subr.mxu0 0.0
        %792 = vmatpush1.xpose.msra.mxu0 0.0
        %793 = vmatprep.mubr.f32.mxu0 0.0
        %794 = vmatmul.mubr.f32.gmra.mrb[0].mxu0 %v715
        %v795 = vpop.f32.mrb[0].mxu0
        %v796 = vadd.f32 0.0, %v795
        %v797 = vpop.f32.mrb[0].mxu0
        %798 = vdwg.mxu0
        %v799 = vld [vmem:[%s7] sm:$0xf]
        %v800 = vmul.f32 %v799, %v796
        %vm801 = vcmask 257024
        %v802 = vsel %vm801, %v800, 0.0
        %v803 = vrot.slane %v802, 4
        %v804 = vadd.f32 %v802, %v803
        %v805 = vrot.slane %v804, 2
        %v806 = vadd.f32 %v804, %v805
        %v807 = vrot.slane %v806, 1
        %v808 = vadd.f32 %v806, %v807
        %v809 = vld [vmem:[%s8] sm:$0xf]
        %v810 = vmul.f32 %v809, %v808
        %vm811 = vcmask 261120
        %v813 = vsel %vm811, %v810, 0
        %815 = vmatprep.subr.mxu0 0.0
        %816 = vmatpush1.msra.mxu0 %v571
        %817 = vmatprep.subr.mxu0 0.0
        %818 = vmatpush1.msra.mxu0 %v576
        %819 = vmatprep.subr.mxu0 0.0
        %820 = vmatpush1.msra.mxu0 %v581
        %821 = vmatprep.subr.mxu0 0.0
        %822 = vmatpush1.msra.mxu0 %v586
        %823 = vmatprep.subr.mxu0 0.0
        %824 = vmatpush1.msra.mxu0 0.0
        %825 = vmatprep.subr.mxu0 0.0
        %826 = vmatpush1.msra.mxu0 0.0
        %827 = vmatprep.subr.mxu0 0.0
        %828 = vmatpush1.msra.mxu0 0.0
        %829 = vmatprep.subr.mxu0 0.0
        %830 = vmatpush1.msra.mxu0 0.0
        %831 = vmatprep.subr.mxu0 0.0
        %832 = vmatpush1.msra.mxu0 0.0
        %833 = vmatprep.subr.mxu0 0.0
        %834 = vmatpush1.msra.mxu0 0.0
        %835 = vmatprep.subr.mxu0 0.0
        %836 = vmatpush1.msra.mxu0 0.0
        %837 = vmatprep.subr.mxu0 0.0
        %838 = vmatpush1.msra.mxu0 0.0
        %839 = vmatprep.subr.mxu0 0.0
        %840 = vmatpush1.msra.mxu0 0.0
        %841 = vmatprep.subr.mxu0 0.0
        %842 = vmatpush1.msra.mxu0 0.0
        %843 = vmatprep.subr.mxu0 0.0
        %844 = vmatpush1.msra.mxu0 0.0
        %845 = vmatprep.subr.mxu0 0.0
        %846 = vmatpush1.msra.mxu0 0.0
        %847 = vmatprep.subr.mxu0 0.0
        %848 = vmatpush1.msra.mxu0 0.0
        %849 = vmatprep.subr.mxu0 0.0
        %850 = vmatpush1.msra.mxu0 0.0
        %851 = vmatprep.subr.mxu0 0.0
        %852 = vmatpush1.msra.mxu0 0.0
        %853 = vmatprep.subr.mxu0 0.0
        %854 = vmatpush1.msra.mxu0 0.0
        %855 = vmatprep.subr.mxu0 0.0
        %856 = vmatpush1.msra.mxu0 0.0
        %857 = vmatprep.subr.mxu0 0.0
        %858 = vmatpush1.msra.mxu0 0.0
        %859 = vmatprep.subr.mxu0 0.0
        %860 = vmatpush1.msra.mxu0 0.0
        %861 = vmatprep.subr.mxu0 0.0
        %862 = vmatpush1.msra.mxu0 0.0
        %863 = vmatprep.subr.mxu0 0.0
        %864 = vmatpush1.msra.mxu0 0.0
        %865 = vmatprep.subr.mxu0 0.0
        %866 = vmatpush1.msra.mxu0 0.0
        %867 = vmatprep.subr.mxu0 0.0
        %868 = vmatpush1.msra.mxu0 0.0
        %869 = vmatprep.subr.mxu0 0.0
        %870 = vmatpush1.msra.mxu0 0.0
        %871 = vmatprep.subr.mxu0 0.0
        %872 = vmatpush1.msra.mxu0 0.0
        %873 = vmatprep.subr.mxu0 0.0
        %874 = vmatpush1.msra.mxu0 0.0
        %875 = vmatprep.subr.mxu0 0.0
        %876 = vmatpush1.msra.mxu0 0.0
        %877 = vmatprep.subr.mxu0 0.0
        %878 = vmatpush1.msra.mxu0 0.0
        %879 = vmatprep.mubr.f32.mxu0 0.0
        %880 = vmatmul.mubr.f32.gmra.mrb[0].mxu0 %v813
        %v881 = vpop.f32.mrb[0].mxu0
        %v882 = vadd.f32 0.0, %v881
        %v883 = vpop.f32.mrb[0].mxu0
        %884 = vdwg.mxu0
        %vm885 = vcmask 519168
        %886 = vst.msk [vmem:[%s323] sm:$0xf] %vm885, %v882
        %s887 = sand.u32 %s225, 1
        %s888 = scalar_lea.sflag [#allocation3], %s887
        %s889 = sand.u32 %s225, 1
        %s890 = smul.addr %s889, 4
        %s891 = scalar_lea.vmem [#allocation2], %s890
        // Predicated region
        $region57: #{tpu_custom_call.1} parent=55 // pred_check
          %p892 = pneg %p235
        $region58: #{tpu_custom_call.1} parent=55 // pred_check_branch
          %894 = sbr.rel (%p892) target = $region60
        $region59: #{tpu_custom_call.1} parent=55 // pred_region
          %s896 = ssub.s32 64, 64
          %897 = vsyncadd %s888, %s896
          %s898 = smul.addr %s23, 64
          %s899 = scalar_lea.hbm %s9, %s898
          %s901 = sshll.u32 %s891, 4
          %s902 = int_to_ptr.vmem [resolvable:$true] %s901
          %904 = dma.vmem_to_hbm [thread:$0]  %s902, 64, %s899, %s888
        $region60: #{tpu_custom_call.1} parent=55 // pred_fallthru
          _
      $region56: #{tpu_custom_call.1} parent=5 // pred_fallthru
        _
      %p905 = scmp.le.s32.totalorder 2, %s18
      // Predicated region
      $region61: #{tpu_custom_call.1} parent=5 // pred_check
        %p906 = pneg %p905
      $region62: #{tpu_custom_call.1} parent=5 // pred_check_branch
        %908 = sbr.rel (%p906) target = $region64
      $region63: #{tpu_custom_call.1} parent=5 // pred_region
        %s909 = ssub.s32 %s18, 2
        // Predicated region
        $region65: #{tpu_custom_call.1} parent=63 // pred_check
          %p910 = pneg %p241
        $region66: #{tpu_custom_call.1} parent=63 // pred_check_branch
          %912 = sbr.rel (%p910) target = $region68
        $region67: #{tpu_custom_call.1} parent=63 // pred_region
          %s913 = sand.u32 %s226, 1
          %s914 = scalar_lea.sflag [#allocation3], %s913
          %s915 = sand.u32 %s226, 1
          %s916 = smul.addr %s915, 4
          %s917 = scalar_lea.vmem [#allocation2], %s916
          %918 = dma.done %s914, 64
        $region68: #{tpu_custom_call.1} parent=63 // pred_fallthru
          _
      $region64: #{tpu_custom_call.1} parent=5 // pred_fallthru
        _
    $region6: #{tpu_custom_call.1} parent=1 // loop_footer
      %s22 = sadd.s32 1, %s18
    $region7: #{tpu_custom_call.1} parent=1 // loop_footer_branch
      %17 = sbr.rel target = $region3
    $region8: #{tpu_custom_call.1} parent=1 // loop_exit
      _
    %919 = vsyncpa [#allocation3], 1
    %s920 = scalar_lea.sflag [#allocation3], 1
    %921 = vsyncpa %s920, 1

</llo_original>
